<compile_context>
chip_gen: v7x
topology: tpu7x:2x2x1
jax: 0.10.0
libtpu: 0.0.40
codegen_flags: <defaults>
</compile_context>

<pallas_src>
import math

import jax
import jax.numpy as jnp
from jax.experimental import pallas as pl
from jax.experimental.pallas import tpu as pltpu

# ---------------- configuration (small, consistent with the module) ----------------
B = 2               # batch
DIM = 32            # embedding dim C
NUM_HEADS = 4
HEAD_DIM = DIM // NUM_HEADS
MLP_RATIO = 4
HIDDEN = DIM * MLP_RATIO      # 128
H = 8
W = 8
N = H * W                     # 64 tokens
SCALE = HEAD_DIM ** (-0.5)
LN_EPS = 1e-5
NEG_INF = -1e30

# rows of the packed (8, 128) "small vectors" parameter slab
R_N1W, R_N1B, R_N2W, R_N2B, R_PB, R_F2B, R_F1B, R_DWB = range(8)


# ---------------- hardware-dependent grid layout ----------------
def _tensorcores_per_chip():
    try:
        kind = jax.devices()[0].device_kind.lower()
        if "v7" in kind or "7x" in kind:
            return 2
    except Exception:
        pass
    return 1


TC_PER_CHIP = _tensorcores_per_chip()
# v5e/v6e (1 TC): fold the whole batch into one 128-row grid step.
# v7x (2 TC):     keep grid=(B,) "parallel" so each TensorCore takes one image.
IMGS_PER_STEP = 1 if TC_PER_CHIP >= 2 else B
GRID_B = B // IMGS_PER_STEP
ROWS = IMGS_PER_STEP * N


# ---------------- in-kernel helpers ----------------
def _layernorm(v, w, b):
    mu = jnp.mean(v, axis=-1, keepdims=True)
    var = jnp.mean(jnp.square(v - mu), axis=-1, keepdims=True)
    return (v - mu) * jax.lax.rsqrt(var + LN_EPS) * w + b


def _gelu_tanh(x):
    # tanh-approx GELU (EUP tanh); diff vs exact erf GELU ~1e-3, far under test tolerance.
    c = math.sqrt(2.0 / math.pi)
    return 0.5 * x * (1.0 + jnp.tanh(c * (x + 0.044715 * x * x * x)))


# ---------------- pltpu.roll direction probe (one tiny build-time compile) ----------------
def _detect_roll_sign():
    """Return s such that pltpu.roll(x, shift=(s*k) % n, axis=0)[i] == x[(i + k) % n]."""
    def probe(x_ref, o_ref):
        o_ref[...] = pltpu.roll(x_ref[...], shift=1, axis=0)

    xp = jnp.arange(8 * 128, dtype=jnp.int32).reshape(8, 128)
    yp = pl.pallas_call(probe, out_shape=jax.ShapeDtypeStruct((8, 128), jnp.int32))(xp)
    # jnp.roll convention: row 1 of the rolled array equals row 0 of the input.
    return -1 if int(yp[1, 0]) == int(xp[0, 0]) else 1


# ---------------- fused Block kernel (one grid step = IMGS_PER_STEP images) ----------------
def make_block_kernel(roll_sign):
    def block_kernel(x_ref, vec_ref, qkvw_ref, pwh_ref, f1w_ref, dwwm_ref, f2w_ref,
                     bias_ref, o_ref):
        x = x_ref[...]                       # (ROWS, DIM) f32
        vec = vec_ref[...]                   # (8, 128) packed small vectors
        n1w = vec[R_N1W:R_N1W + 1, :DIM]
        n1b = vec[R_N1B:R_N1B + 1, :DIM]
        n2w = vec[R_N2W:R_N2W + 1, :DIM]
        n2b = vec[R_N2B:R_N2B + 1, :DIM]
        pb = vec[R_PB:R_PB + 1, :DIM]
        f2b = vec[R_F2B:R_F2B + 1, :DIM]
        f1b = vec[R_F1B:R_F1B + 1, :]
        dwb = vec[R_DWB:R_DWB + 1, :]

        # ---------- attention branch: x + proj(softmax(q k^T) v) ----------
        xn = _layernorm(x, n1w, n1b)                                      # (ROWS, DIM)
        # single lane-dense fused q/k/v projection (q columns pre-scaled by SCALE host-side)
        qkv = jnp.dot(xn.astype(jnp.bfloat16), qkvw_ref[...],
                      preferred_element_type=jnp.float32)                 # (ROWS, 96)
        bias = bias_ref[...]                                              # (ROWS, ROWS)

        attn_out = None
        for h in range(NUM_HEADS):
            q_h = qkv[:, h * HEAD_DIM:(h + 1) * HEAD_DIM].astype(jnp.bfloat16)
            k_h = qkv[:, DIM + h * HEAD_DIM:DIM + (h + 1) * HEAD_DIM].astype(jnp.bfloat16)
            v_h = qkv[:, 2 * DIM + h * HEAD_DIM:2 * DIM + (h + 1) * HEAD_DIM].astype(jnp.bfloat16)
            # scores: q_h @ k_h^T (contract the 8-wide head dim of both operands)
            s = jax.lax.dot_general(q_h, k_h, (((1,), (1,)), ((), ())),
                                    preferred_element_type=jnp.float32)   # (ROWS, ROWS)
            s = s + bias                     # block-diagonal mask: keeps images independent
            s = s - jnp.max(s, axis=-1, keepdims=True)
            e = jnp.exp(s)
            p = e * pl.reciprocal(jnp.sum(e, axis=-1, keepdims=True), approx=True)
            o_h = jnp.dot(p.astype(jnp.bfloat16), v_h,
                          preferred_element_type=jnp.float32)              # (ROWS, HEAD_DIM)
            contrib = jnp.dot(o_h.astype(jnp.bfloat16), pwh_ref[h],
                              preferred_element_type=jnp.float32)          # (ROWS, DIM)
            attn_out = contrib if attn_out is None else attn_out + contrib

        x1 = x + attn_out + pb                                             # residual 1

        # ---------- MLP branch: x1 + fc2(GELU(DWConv3x3(fc1(LN2(x1))))) ----------
        xn2 = _layernorm(x1, n2w, n2b)
        h1 = jnp.dot(xn2.astype(jnp.bfloat16), f1w_ref[...],
                     preferred_element_type=jnp.float32) + f1b             # (ROWS, HIDDEN)

        # depthwise 3x3 conv (stride 1, pad 1) on the flat (ROWS, HIDDEN) layout:
        # neighbour (i+di, j+dj) lives at flat index n + di*W + dj; fetch it with an XLU
        # roll.  Border (and cross-image) validity is pre-folded into dwwm host-side.
        acc = h1 * dwwm_ref[4] + dwb                                       # centre tap + bias
        for di in (-1, 0, 1):
            for dj in (-1, 0, 1):
                if di == 0 and dj == 0:
                    continue
                kidx = 3 * (di + 1) + (dj + 1)                             # torch tap index
                shift = (roll_sign * (di * W + dj)) % ROWS
                acc = acc + pltpu.roll(h1, shift=shift, axis=0) * dwwm_ref[kidx]

        h3 = _gelu_tanh(acc)
        out = jnp.dot(h3.astype(jnp.bfloat16), f2w_ref[...],
                      preferred_element_type=jnp.float32) + f2b            # (ROWS, DIM)
        o_ref[...] = x1 + out                                              # residual 2

    return block_kernel


def make_block_forward():
    roll_sign = _detect_roll_sign()
    kernel = make_block_kernel(roll_sign)

    # advisory cost estimate for XLA scheduling around the custom call
    flops = (2 * B * N * DIM * (3 * DIM)                        # qkv projection
             + 2 * GRID_B * NUM_HEADS * 2 * ROWS * ROWS * HEAD_DIM  # scores + p@v
             + 2 * B * N * DIM * DIM                            # output projection
             + 2 * B * N * DIM * HIDDEN                         # fc1
             + 2 * 9 * B * N * HIDDEN                           # dwconv taps
             + 2 * B * N * HIDDEN * DIM)                        # fc2
    transcendentals = GRID_B * NUM_HEADS * ROWS * ROWS + B * N * HIDDEN + 2 * B * N
    bytes_accessed = (2 * B * N * DIM * 4 + 8 * 128 * 4
                      + DIM * 3 * DIM * 2 + NUM_HEADS * HEAD_DIM * DIM * 2
                      + DIM * HIDDEN * 2 + HIDDEN * DIM * 2
                      + 9 * ROWS * HIDDEN * 4 + ROWS * ROWS * 4)

    call = pl.pallas_call(
        kernel,
        out_shape=jax.ShapeDtypeStruct((B * N, DIM), jnp.float32),
        grid_spec=pltpu.PrefetchScalarGridSpec(
            num_scalar_prefetch=0,
            grid=(GRID_B,),
            in_specs=[
                pl.BlockSpec((ROWS, DIM), lambda b: (b, 0)),                    # x (flattened)
                pl.BlockSpec((8, 128), lambda b: (0, 0)),                       # packed vectors
                pl.BlockSpec((DIM, 3 * DIM), lambda b: (0, 0)),                 # fused qkv weight (bf16)
                pl.BlockSpec((NUM_HEADS, HEAD_DIM, DIM), lambda b: (0, 0, 0)),  # per-head proj (bf16)
                pl.BlockSpec((DIM, HIDDEN), lambda b: (0, 0)),                  # fc1 (bf16)
                pl.BlockSpec((9, ROWS, HIDDEN), lambda b: (0, 0, 0)),           # masked dwconv taps
                pl.BlockSpec((HIDDEN, DIM), lambda b: (0, 0)),                  # fc2 (bf16)
                pl.BlockSpec((ROWS, ROWS), lambda b: (0, 0)),                   # attention block mask
            ],
            out_specs=pl.BlockSpec((ROWS, DIM), lambda b: (b, 0)),
        ),
        compiler_params=pltpu.CompilerParams(
            dimension_semantics=("parallel",)),   # engages both TCs on v7x; harmless elsewhere
        cost_estimate=pl.CostEstimate(flops=flops, transcendentals=transcendentals,
                                      bytes_accessed=bytes_accessed),
    )

    @jax.jit
    def block_forward(x, packed):
        y = call(x.reshape(B * N, DIM), packed["vec"], packed["qkvw"], packed["pwh"],
                 packed["f1w"], packed["dwwm"], packed["f2w"], packed["bias"])
        return y.reshape(B, N, DIM)

    return block_forward


# ---------------- deterministic params (torch layout) + one-off kernel repack ----------------
def init_params(key):
    """Torch-layout parameters (Linear weights stored (in, out) so the math is x @ W)."""
    ks = jax.random.split(key, 6)
    std = 0.02
    p = {}
    p["n1w"] = jnp.ones((1, DIM), jnp.float32)
    p["n1b"] = jnp.zeros((1, DIM), jnp.float32)
    p["n2w"] = jnp.ones((1, DIM), jnp.float32)
    p["n2b"] = jnp.zeros((1, DIM), jnp.float32)
    p["qw"] = std * jax.random.normal(ks[0], (DIM, DIM), jnp.float32)        # q  (qkv_bias=False)
    p["kvw"] = std * jax.random.normal(ks[1], (DIM, 2 * DIM), jnp.float32)   # kv (no bias)
    p["pw"] = std * jax.random.normal(ks[2], (DIM, DIM), jnp.float32)        # proj
    p["pb"] = jnp.zeros((1, DIM), jnp.float32)
    p["f1w"] = std * jax.random.normal(ks[3], (DIM, HIDDEN), jnp.float32)    # fc1
    p["f1b"] = jnp.zeros((1, HIDDEN), jnp.float32)
    dw_std = math.sqrt(2.0 / 9.0)                 # Conv2d fan_out init, fan_out = 3*3*C/C = 9
    dw_t = dw_std * jax.random.normal(ks[4], (HIDDEN, 1, 3, 3), jnp.float32)
    p["dww"] = dw_t.reshape(HIDDEN, 9).T          # (9, HIDDEN), row = 3*ki + kj
    p["dwb"] = jnp.zeros((1, HIDDEN), jnp.float32)
    p["f2w"] = std * jax.random.normal(ks[5], (HIDDEN, DIM), jnp.float32)    # fc2
    p["f2b"] = jnp.zeros((1, DIM), jnp.float32)
    return p


def pack_params(p):
    """One-off host-side repack into the consolidated kernel layout."""
    vec = jnp.zeros((8, 128), jnp.float32)
    vec = vec.at[R_N1W, :DIM].set(p["n1w"].reshape(-1))
    vec = vec.at[R_N1B, :DIM].set(p["n1b"].reshape(-1))
    vec = vec.at[R_N2W, :DIM].set(p["n2w"].reshape(-1))
    vec = vec.at[R_N2B, :DIM].set(p["n2b"].reshape(-1))
    vec = vec.at[R_PB, :DIM].set(p["pb"].reshape(-1))
    vec = vec.at[R_F2B, :DIM].set(p["f2b"].reshape(-1))
    vec = vec.at[R_F1B, :HIDDEN].set(p["f1b"].reshape(-1))
    vec = vec.at[R_DWB, :HIDDEN].set(p["dwb"].reshape(-1))

    # lane-dense fused qkv weight: columns = [q(head-major) | k | v]; q pre-scaled by SCALE
    qkvw = jnp.concatenate([p["qw"] * SCALE, p["kvw"][:, :DIM], p["kvw"][:, DIM:]],
                           axis=1).astype(jnp.bfloat16)                       # (DIM, 96)
    pwh = p["pw"].reshape(NUM_HEADS, HEAD_DIM, DIM).astype(jnp.bfloat16)      # (4, 8, 32)
    f1w = p["f1w"].astype(jnp.bfloat16)
    f2w = p["f2w"].astype(jnp.bfloat16)

    # depthwise-conv tap weights with per-image border masks pre-folded (per flat pixel)
    n_local = jnp.arange(ROWS, dtype=jnp.int32) % N
    row = n_local // W
    col = n_local % W
    slabs = []
    for di in (-1, 0, 1):
        for dj in (-1, 0, 1):
            kidx = 3 * (di + 1) + (dj + 1)
            valid = ((row + di >= 0) & (row + di < H) &
                     (col + dj >= 0) & (col + dj < W)).astype(jnp.float32)    # (ROWS,)
            slabs.append(valid[:, None] * p["dww"][kidx][None, :])            # (ROWS, HIDDEN)
    dwwm = jnp.stack(slabs, axis=0)                                           # (9, ROWS, HIDDEN)

    # additive block-diagonal attention mask: 0 within an image, -1e30 across images
    img = jnp.arange(ROWS, dtype=jnp.int32) // N
    bias = jnp.where(img[:, None] == img[None, :], 0.0, NEG_INF).astype(jnp.float32)

    return {"vec": vec, "qkvw": qkvw, "pwh": pwh, "f1w": f1w,
            "dwwm": dwwm, "f2w": f2w, "bias": bias}


# ---------------- pure-JAX reference (torch semantics, exact GELU/softmax) ----------------
def block_reference(x, params):
    def layernorm(v, w, b):
        mu = v.mean(-1, keepdims=True)
        var = ((v - mu) ** 2).mean(-1, keepdims=True)
        return (v - mu) / jnp.sqrt(var + LN_EPS) * w.reshape(-1) + b.reshape(-1)

    xn = layernorm(x, params["n1w"], params["n1b"])
    q = xn @ params["qw"]
    kv = xn @ params["kvw"]
    k, v = kv[..., :DIM], kv[..., DIM:]

    def split_heads(t):
        return t.reshape(B, N, NUM_HEADS, HEAD_DIM).transpose(0, 2, 1, 3)

    qh, kh, vh = split_heads(q), split_heads(k), split_heads(v)
    attn = jnp.einsum("bhnd,bhmd->bhnm", qh, kh) * SCALE
    attn = jax.nn.softmax(attn, axis=-1)
    o = jnp.einsum("bhnm,bhmd->bhnd", attn, vh).transpose(0, 2, 1, 3).reshape(B, N, DIM)
    o = o @ params["pw"] + params["pb"].reshape(-1)
    x1 = x + o

    xn2 = layernorm(x1, params["n2w"], params["n2b"])
    h1 = xn2 @ params["f1w"] + params["f1b"].reshape(-1)
    img = h1.reshape(B, H, W, HIDDEN)
    dw = params["dww"].T.reshape(HIDDEN, 3, 3)          # (C, 3, 3) torch layout
    dw_hwio = dw.transpose(1, 2, 0)[:, :, None, :]      # (3, 3, 1, C)
    conv = jax.lax.conv_general_dilated(
        img, dw_hwio, window_strides=(1, 1), padding="SAME",
        dimension_numbers=("NHWC", "HWIO", "NHWC"),
        feature_group_count=HIDDEN)
    conv = conv + params["dwb"].reshape(-1)
    h2 = conv.reshape(B, N, HIDDEN)
    h3 = 0.5 * h2 * (1.0 + jax.scipy.special.erf(h2 / math.sqrt(2.0)))
    out = h3 @ params["f2w"] + params["f2b"].reshape(-1)
    return x1 + out


if __name__ == "__main__":
    key = jax.random.PRNGKey(0)
    kx, kp = jax.random.split(key)
    params = init_params(kp)
    packed = pack_params(params)
    x = jax.random.normal(kx, (B, N, DIM), jnp.float32)

    block_forward = make_block_forward()
    out = jax.block_until_ready(block_forward(x, packed))

    assert out.shape == (B, N, DIM), out.shape
    assert bool(jnp.all(jnp.isfinite(out)))

    ref = jax.block_until_ready(block_reference(x, params))
    err = float(jnp.max(jnp.abs(out - ref)))
    assert err < 5e-2, f"kernel/reference mismatch: max abs diff = {err}"

    print("KERNEL_OK")
</pallas_src>

<mosaic_0001>
module attributes {stable_mosaic.version = 11 : i64} {
  func.func @probe(%arg0: memref<8x128xi32, #tpu.memory_space<vmem>>, %arg1: memref<8x128xi32, #tpu.memory_space<vmem>>) attributes {dimension_semantics = [], scalar_prefetch = 0 : i64, scratch_operands = 0 : i64, tpu.core_type = #tpu.core_type<tc>} {
    %c0 = arith.constant 0 : index
    %c0_0 = arith.constant 0 : index
    %0 = vector.load %arg0[%c0, %c0_0] : memref<8x128xi32, #tpu.memory_space<vmem>>, vector<8x128xi32>
    %c1_i32 = arith.constant 1 : i32
    %1 = tpu.dynamic_rotate %0 by %c1_i32 dim 0 : vector<8x128xi32>, i32 -> vector<8x128xi32>
    %c0_1 = arith.constant 0 : index
    %c0_2 = arith.constant 0 : index
    %2 = vector.load %arg1[%c0_1, %c0_2] : memref<8x128xi32, #tpu.memory_space<vmem>>, vector<8x128xi32>
    tpu.vector_store %arg1[%c0_1, %c0_2], %1 {strides = array<i32>} : memref<8x128xi32, #tpu.memory_space<vmem>>, vector<8x128xi32>,
    return
  }
}

</mosaic_0001>

<llo_original>
// kernel: tpu_custom_call.1
$region0: #{tpu_custom_call.1}
  #allocation0 [shape = 'u32[]', space=smem, size = 0x4, offset = 0x4, fixed_abs, tag = 'smem constant byte address 0x4 - core index']
  #allocation1 [shape = 'u32[144,128]{1,0:T(1,128)}', space=vmem, size = 0x12000, scoped, tag = 'internal scratch']
  %s0 = inlined_call_operand.hbm [shape: s32[8,128], index: 0, kind: input, shape index: {}]
  %s1 = inlined_call_operand.hbm [shape: s32[8,128], index: 1, kind: output, shape index: {}]
  %s2 = sld [smem:[#allocation0]]
  $region18: #{tpu_custom_call.1} parent=0
    _
  %s4 = ssub.s32 1, %s2
  %s5 = scalar_select 0, %s4, %s2
  $region1: #{tpu_custom_call.1} parent=0
    #allocation2 [shape = 'u8[4096]{0}', space=vmem, size = 0x1000, scoped, tag = 'input window, operand 0, single buffered']
    #allocation3 [shape = 's32[1]{0}', space=sflag, size = 0x4, scoped, tag = 'scoped memory for tpu_custom_call.1']
    #allocation4 [shape = 's32[1]{0}', space=sflag, size = 0x4, scoped, tag = 'scoped memory for tpu_custom_call.1']
    #allocation5 [shape = 'u8[4096]{0}', space=vmem, size = 0x1000, scoped, tag = 'output window, operand 0, single buffered']
    %6 = vsyncpa [#allocation3], 0
    %7 = vsyncpa [#allocation4], 0
    // Predicated region
    $region2: #{tpu_custom_call.1} parent=1 // pred_check
      _
    $region3: #{tpu_custom_call.1} parent=1 // pred_check_branch
      %9 = sbr.rel (0) target = $region5
    $region4: #{tpu_custom_call.1} parent=1 // pred_region
      %s11 = ssub.s32 128, 128
      %12 = vsyncadd [#allocation3], %s11
      %s14 = sshll.u32 [#allocation2], 4
      %s15 = int_to_ptr.vmem [resolvable:$true] %s14
      %17 = dma.hbm_to_vmem [thread:$0]  %s0, 128, %s15, [#allocation3]
    $region5: #{tpu_custom_call.1} parent=1 // pred_fallthru
      _
    // Predicated region
    $region6: #{tpu_custom_call.1} parent=1 // pred_check
      _
    $region7: #{tpu_custom_call.1} parent=1 // pred_check_branch
      %19 = sbr.rel (0) target = $region9
    $region8: #{tpu_custom_call.1} parent=1 // pred_region
      %20 = dma.done [#allocation3], 128
    $region9: #{tpu_custom_call.1} parent=1 // pred_fallthru
      _
    %v21 = vld [vmem:[#allocation2] sm:$0xff]
    %v22 = vrot.slane %v21, 7
    %23 = vst [vmem:[#allocation5] sm:$0xff] %v22
    // Predicated region
    $region10: #{tpu_custom_call.1} parent=1 // pred_check
      _
    $region11: #{tpu_custom_call.1} parent=1 // pred_check_branch
      %25 = sbr.rel (0) target = $region13
    $region12: #{tpu_custom_call.1} parent=1 // pred_region
      %s27 = ssub.s32 128, 128
      %28 = vsyncadd [#allocation4], %s27
      %s30 = sshll.u32 [#allocation5], 4
      %s31 = int_to_ptr.vmem [resolvable:$true] %s30
      %33 = dma.vmem_to_hbm [thread:$0]  %s31, 128, %s1, [#allocation4]
    $region13: #{tpu_custom_call.1} parent=1 // pred_fallthru
      _
    // Predicated region
    $region14: #{tpu_custom_call.1} parent=1 // pred_check
      _
    $region15: #{tpu_custom_call.1} parent=1 // pred_check_branch
      %35 = sbr.rel (0) target = $region17
    $region16: #{tpu_custom_call.1} parent=1 // pred_region
      %36 = dma.done [#allocation4], 128
    $region17: #{tpu_custom_call.1} parent=1 // pred_fallthru
      _
    %37 = vsyncpa [#allocation3], 1
    %38 = vsyncpa [#allocation4], 1

</llo_original>
